<compile_context>
chip_gen: v7x
topology: tpu7x:2x2x1
jax: 0.10.0
libtpu: 0.0.40
codegen_flags: <defaults>
</compile_context>

<pallas_src>
import jax
import jax.numpy as jnp
from jax.experimental import pallas as pl
from jax.experimental.pallas import tpu as pltpu

_LATENT_DIM_AUX = 32
_OUT_DIMS = (256, 128, 64, 32)          # PyTorch layer output widths
# Padded (in, out) shapes actually fed to the MXU. Layer-3 output / layer-4
# input are padded 64 -> 128 with zeros (exact); layer-4 output stays 32 so
# the kernel can store the result directly without an in-kernel lane slice.
_PAD_SHAPES = lambda F: ((F, 256), (256, 128), (128, 128), (128, 32))


def _round_up(x, m):
    return (x + m - 1) // m * m


def _default_act_dtype():
    """bf16 bias-add/tanh chain only on chips with bf16 VPU/EUP (v6e/v7x)."""
    try:
        kind = jax.devices()[0].device_kind.lower()
    except Exception:  # pragma: no cover - no device info
        return jnp.float32
    if any(tag in kind for tag in ("v6", "v7", "tpu7", "7x")):
        return jnp.bfloat16
    return jnp.float32


def _make_mlp_aux_kernel(act_dtype):
    def kernel(x_ref,
               w1_ref, b1_ref,
               w2_ref, b2_ref,
               w3_ref, b3_ref,
               w4_ref, b4_ref,
               out_ref):
        def layer(h, w_ref, b_ref):
            # bf16 operands on the MXU, f32 accumulate, bias+tanh in act_dtype
            # (bf16 on v6e/v7x -> EUP/VPU bf16 path; f32 on v5e).
            acc = jnp.dot(h.astype(jnp.bfloat16), w_ref[...],
                          preferred_element_type=jnp.float32)
            return jnp.tanh(acc.astype(act_dtype) + b_ref[...])

        h = x_ref[...]
        h = layer(h, w1_ref, b1_ref)
        h = layer(h, w2_ref, b2_ref)
        h = layer(h, w3_ref, b3_ref)
        h = layer(h, w4_ref, b4_ref)          # [TB, 32]
        out_ref[...] = h.astype(out_ref.dtype)

    return kernel


def prepare_params(params, feature_dim, act_dtype=None):
    """Convert [in,out]-layout f32 params into kernel-ready form:
       - weights zero-padded (layer-3 out / layer-4 in -> 128), cast to bf16,
       - biases zero-padded [1, width] rows in the activation dtype."""
    if act_dtype is None:
        act_dtype = _default_act_dtype()
    in_dims = (feature_dim,) + _OUT_DIMS[:-1]
    pads = _PAD_SHAPES(feature_dim)

    prepped = []
    for i in range(4):
        w, b = params[f"l{i + 1}"]
        din, dout = in_dims[i], _OUT_DIMS[i]
        pin, pout = pads[i]
        wp = jnp.zeros((pin, pout), jnp.float32)
        wp = wp.at[:din, :dout].set(w.astype(jnp.float32))
        bp = jnp.zeros((1, pout), jnp.float32)
        bp = bp.at[:, :dout].set(jnp.reshape(b, (1, -1)).astype(jnp.float32))
        prepped.append((wp.astype(jnp.bfloat16), bp.astype(act_dtype)))
    return tuple(prepped)


def mlp_extractor_aux(features, prepped_params, *, act_dtype=None,
                      block_b=2048, min_grid=2):
    """features: [B, feature_dim] f32 (or bf16). prepped_params: prepare_params
    output. Returns [B, 32] f32 latent (same as the PyTorch module forward)."""
    if act_dtype is None:
        act_dtype = _default_act_dtype()
    B, F = features.shape
    (w1, b1), (w2, b2), (w3, b3), (w4, b4) = prepped_params

    # Batch tile: multiple of 8, capped at block_b, and split so the grid has
    # >= min_grid steps (v7x TC parallelism) whenever B is large enough.
    TB = _round_up(min(block_b, _round_up(pl.cdiv(B, max(min_grid, 1)), 8)), 8)
    TB = max(TB, 8)
    B_pad = _round_up(B, TB)
    x = features
    if B_pad != B:                         # avoid OOB reads on ragged blocks
        x = jnp.pad(x, ((0, B_pad - B), (0, 0)))
    grid = (B_pad // TB,)

    def const_spec(shape):                 # weights/biases: resident in VMEM
        return pl.BlockSpec(shape, lambda i: (0, 0))

    weight_bytes = sum(int(a.size) * a.dtype.itemsize
                       for pair in prepped_params for a in pair)
    x_bytes = x.dtype.itemsize
    cost = pl.CostEstimate(
        flops=2 * B_pad * (F * 256 + 256 * 128 + 128 * 128 + 128 * 32),
        transcendentals=B_pad * (256 + 128 + 128 + 32),
        bytes_accessed=B_pad * (F * x_bytes + _LATENT_DIM_AUX * 4)
        + weight_bytes,
    )
    # Scoped-VMEM estimate: double-buffered I/O tiles + resident weights +
    # headroom for the [TB,256] f32 intermediates in internal scratch.
    vmem_est = (2 * TB * F * x_bytes + 2 * TB * _LATENT_DIM_AUX * 4
                + 2 * weight_bytes + 3 * TB * 256 * 4 + (4 << 20))
    vmem_limit = int(min(max(vmem_est, 32 << 20), 64 << 20))

    out = pl.pallas_call(
        _make_mlp_aux_kernel(act_dtype),
        out_shape=jax.ShapeDtypeStruct((B_pad, _LATENT_DIM_AUX), jnp.float32),
        grid=grid,
        in_specs=[
            # TODO(synk): if profiling shows exposed input DMA, bump this
            # spec to pipeline_mode=pl.Buffered(3).
            pl.BlockSpec((TB, F), lambda i: (i, 0)),
            const_spec(w1.shape), const_spec(b1.shape),
            const_spec(w2.shape), const_spec(b2.shape),
            const_spec(w3.shape), const_spec(b3.shape),
            const_spec(w4.shape), const_spec(b4.shape),
        ],
        out_specs=pl.BlockSpec((TB, _LATENT_DIM_AUX), lambda i: (i, 0)),
        compiler_params=pltpu.CompilerParams(
            dimension_semantics=("parallel",),
            vmem_limit_bytes=vmem_limit,
        ),
        cost_estimate=cost,
    )(x, w1, b1, w2, b2, w3, b3, w4, b4)

    return out[:B] if B_pad != B else out


def init_params(key, feature_dim):
    """Deterministic PyTorch-style (uniform +/- 1/sqrt(fan_in)) init.
    Weights stored as [in, out] (transposed vs. PyTorch's [out, in])."""
    dims = [feature_dim] + list(_OUT_DIMS)
    params = {}
    for i, (din, dout) in enumerate(zip(dims[:-1], dims[1:]), start=1):
        key, kw, kb = jax.random.split(key, 3)
        bound = 1.0 / jnp.sqrt(jnp.float32(din))
        w = jax.random.uniform(kw, (din, dout), jnp.float32, -bound, bound)
        b = jax.random.uniform(kb, (1, dout), jnp.float32, -bound, bound)
        params[f"l{i}"] = (w, b)
    return params


def reference_forward(features, params):
    """Pure-JAX f32 reference (same math as the PyTorch module)."""
    h = features
    for i in range(1, 5):
        w, b = params[f"l{i}"]
        h = jnp.tanh(h @ w + b)
    return h


if __name__ == "__main__":
    key = jax.random.PRNGKey(0)
    B, feature_dim = 24, 64        # small demo; TB=16 -> 2 grid steps + padding

    kx, kp = jax.random.split(key)
    features = jax.random.normal(kx, (B, feature_dim), jnp.float32)
    params = init_params(kp, feature_dim)

    act_dtype = _default_act_dtype()
    prepped = prepare_params(params, feature_dim, act_dtype=act_dtype)

    out = mlp_extractor_aux(features, prepped, act_dtype=act_dtype)
    out = jax.block_until_ready(out)

    ref = reference_forward(features, params)
    assert out.shape == (B, _LATENT_DIM_AUX)
    # bf16 MXU operands (+ bf16 tanh chain on v6e/v7x), f32 accumulate
    assert jnp.allclose(out, ref, atol=4e-2, rtol=4e-2), \
        f"max abs diff {jnp.max(jnp.abs(out - ref))}"

    print("KERNEL_OK")
</pallas_src>

<mosaic_0001>
module attributes {stable_mosaic.version = 11 : i64} {
  func.func @kernel(%arg0: i32, %arg1: memref<16x64xf32, #tpu.memory_space<vmem>>, %arg2: memref<64x256xbf16, #tpu.memory_space<vmem>>, %arg3: memref<1x256xf32, #tpu.memory_space<vmem>>, %arg4: memref<256x128xbf16, #tpu.memory_space<vmem>>, %arg5: memref<1x128xf32, #tpu.memory_space<vmem>>, %arg6: memref<128x128xbf16, #tpu.memory_space<vmem>>, %arg7: memref<1x128xf32, #tpu.memory_space<vmem>>, %arg8: memref<128x32xbf16, #tpu.memory_space<vmem>>, %arg9: memref<1x32xf32, #tpu.memory_space<vmem>>, %arg10: memref<16x32xf32, #tpu.memory_space<vmem>>) attributes {dimension_semantics = [#tpu.dimension_semantics<parallel>], iteration_bounds = array<i64: 2>, scalar_prefetch = 0 : i64, scratch_operands = 0 : i64, tpu.core_type = #tpu.core_type<tc>, window_params = [{transform_indices = @transform_0, window_bounds = array<i64: 16, 64>}, {pipeline_mode = #tpu.pipeline_mode<synchronous>, transform_indices = @transform_1, window_bounds = array<i64: 64, 256>}, {pipeline_mode = #tpu.pipeline_mode<synchronous>, transform_indices = @transform_2, window_bounds = array<i64: 1, 256>}, {pipeline_mode = #tpu.pipeline_mode<synchronous>, transform_indices = @transform_3, window_bounds = array<i64: 256, 128>}, {pipeline_mode = #tpu.pipeline_mode<synchronous>, transform_indices = @transform_4, window_bounds = array<i64: 1, 128>}, {pipeline_mode = #tpu.pipeline_mode<synchronous>, transform_indices = @transform_5, window_bounds = array<i64: 128, 128>}, {pipeline_mode = #tpu.pipeline_mode<synchronous>, transform_indices = @transform_6, window_bounds = array<i64: 1, 128>}, {pipeline_mode = #tpu.pipeline_mode<synchronous>, transform_indices = @transform_7, window_bounds = array<i64: 128, 32>}, {pipeline_mode = #tpu.pipeline_mode<synchronous>, transform_indices = @transform_8, window_bounds = array<i64: 1, 32>}, {transform_indices = @transform_9, window_bounds = array<i64: 16, 32>}]} {
    %c0 = arith.constant 0 : index
    %c0_0 = arith.constant 0 : index
    %0 = vector.load %arg1[%c0, %c0_0] : memref<16x64xf32, #tpu.memory_space<vmem>>, vector<16x64xf32>
    %1 = arith.truncf %0 : vector<16x64xf32> to vector<16x64xbf16>
    %c0_1 = arith.constant 0 : index
    %c0_2 = arith.constant 0 : index
    %2 = vector.load %arg2[%c0_1, %c0_2] : memref<64x256xbf16, #tpu.memory_space<vmem>>, vector<64x256xbf16>
    %cst = arith.constant dense<0.000000e+00> : vector<16x256xf32>
    %3 = tpu.matmul %1, %2, %cst {dimension_numbers = #tpu.dot_dimension_numbers<[1], [0], [0], [1], [0, 0, 1, 1], [], []>} : vector<16x64xbf16>, vector<64x256xbf16>, vector<16x256xf32> -> vector<16x256xf32>
    %c0_3 = arith.constant 0 : index
    %c0_4 = arith.constant 0 : index
    %4 = vector.load %arg3[%c0_3, %c0_4] : memref<1x256xf32, #tpu.memory_space<vmem>>, vector<1x256xf32>
    %5 = vector.broadcast %4 : vector<1x256xf32> to vector<16x256xf32>
    %6 = arith.addf %3, %5 : vector<16x256xf32>
    %7 = math.tanh %6 : vector<16x256xf32>
    %8 = arith.truncf %7 : vector<16x256xf32> to vector<16x256xbf16>
    %c0_5 = arith.constant 0 : index
    %c0_6 = arith.constant 0 : index
    %9 = vector.load %arg4[%c0_5, %c0_6] : memref<256x128xbf16, #tpu.memory_space<vmem>>, vector<256x128xbf16>
    %cst_7 = arith.constant dense<0.000000e+00> : vector<16x128xf32>
    %10 = tpu.matmul %8, %9, %cst_7 {dimension_numbers = #tpu.dot_dimension_numbers<[1], [0], [0], [1], [0, 0, 1, 1], [], []>} : vector<16x256xbf16>, vector<256x128xbf16>, vector<16x128xf32> -> vector<16x128xf32>
    %c0_8 = arith.constant 0 : index
    %c0_9 = arith.constant 0 : index
    %11 = vector.load %arg5[%c0_8, %c0_9] : memref<1x128xf32, #tpu.memory_space<vmem>>, vector<1x128xf32>
    %12 = vector.broadcast %11 : vector<1x128xf32> to vector<16x128xf32>
    %13 = arith.addf %10, %12 : vector<16x128xf32>
    %14 = math.tanh %13 : vector<16x128xf32>
    %15 = arith.truncf %14 : vector<16x128xf32> to vector<16x128xbf16>
    %c0_10 = arith.constant 0 : index
    %c0_11 = arith.constant 0 : index
    %16 = vector.load %arg6[%c0_10, %c0_11] : memref<128x128xbf16, #tpu.memory_space<vmem>>, vector<128x128xbf16>
    %cst_12 = arith.constant dense<0.000000e+00> : vector<16x128xf32>
    %17 = tpu.matmul %15, %16, %cst_12 {dimension_numbers = #tpu.dot_dimension_numbers<[1], [0], [0], [1], [0, 0, 1, 1], [], []>} : vector<16x128xbf16>, vector<128x128xbf16>, vector<16x128xf32> -> vector<16x128xf32>
    %c0_13 = arith.constant 0 : index
    %c0_14 = arith.constant 0 : index
    %18 = vector.load %arg7[%c0_13, %c0_14] : memref<1x128xf32, #tpu.memory_space<vmem>>, vector<1x128xf32>
    %19 = vector.broadcast %18 : vector<1x128xf32> to vector<16x128xf32>
    %20 = arith.addf %17, %19 : vector<16x128xf32>
    %21 = math.tanh %20 : vector<16x128xf32>
    %22 = arith.truncf %21 : vector<16x128xf32> to vector<16x128xbf16>
    %c0_15 = arith.constant 0 : index
    %c0_16 = arith.constant 0 : index
    %23 = vector.load %arg8[%c0_15, %c0_16] : memref<128x32xbf16, #tpu.memory_space<vmem>>, vector<128x32xbf16>
    %cst_17 = arith.constant dense<0.000000e+00> : vector<16x32xf32>
    %24 = tpu.matmul %22, %23, %cst_17 {dimension_numbers = #tpu.dot_dimension_numbers<[1], [0], [0], [1], [0, 0, 1, 1], [], []>} : vector<16x128xbf16>, vector<128x32xbf16>, vector<16x32xf32> -> vector<16x32xf32>
    %c0_18 = arith.constant 0 : index
    %c0_19 = arith.constant 0 : index
    %25 = vector.load %arg9[%c0_18, %c0_19] : memref<1x32xf32, #tpu.memory_space<vmem>>, vector<1x32xf32>
    %26 = vector.broadcast %25 : vector<1x32xf32> to vector<16x32xf32>
    %27 = arith.addf %24, %26 : vector<16x32xf32>
    %28 = math.tanh %27 : vector<16x32xf32>
    %c0_20 = arith.constant 0 : index
    %c0_21 = arith.constant 0 : index
    %29 = vector.load %arg10[%c0_20, %c0_21] : memref<16x32xf32, #tpu.memory_space<vmem>>, vector<16x32xf32>
    tpu.vector_store %arg10[%c0_20, %c0_21], %28 {strides = array<i32>} : memref<16x32xf32, #tpu.memory_space<vmem>>, vector<16x32xf32>,
    return
  }
  func.func @transform_0(%arg0: i32) -> (i32, i32) {
    %c0_i32 = arith.constant 0 : i32
    %c0_i32_0 = arith.constant 0 : i32
    return %arg0, %c0_i32 : i32, i32
  }
  func.func @transform_1(%arg0: i32) -> (i32, i32) {
    %c0_i32 = arith.constant 0 : i32
    %c0_i32_0 = arith.constant 0 : i32
    %c0_i32_1 = arith.constant 0 : i32
    return %c0_i32, %c0_i32_0 : i32, i32
  }
  func.func @transform_2(%arg0: i32) -> (i32, i32) {
    %c0_i32 = arith.constant 0 : i32
    %c0_i32_0 = arith.constant 0 : i32
    %c0_i32_1 = arith.constant 0 : i32
    return %c0_i32, %c0_i32_0 : i32, i32
  }
  func.func @transform_3(%arg0: i32) -> (i32, i32) {
    %c0_i32 = arith.constant 0 : i32
    %c0_i32_0 = arith.constant 0 : i32
    %c0_i32_1 = arith.constant 0 : i32
    return %c0_i32, %c0_i32_0 : i32, i32
  }
  func.func @transform_4(%arg0: i32) -> (i32, i32) {
    %c0_i32 = arith.constant 0 : i32
    %c0_i32_0 = arith.constant 0 : i32
    %c0_i32_1 = arith.constant 0 : i32
    return %c0_i32, %c0_i32_0 : i32, i32
  }
  func.func @transform_5(%arg0: i32) -> (i32, i32) {
    %c0_i32 = arith.constant 0 : i32
    %c0_i32_0 = arith.constant 0 : i32
    %c0_i32_1 = arith.constant 0 : i32
    return %c0_i32, %c0_i32_0 : i32, i32
  }
  func.func @transform_6(%arg0: i32) -> (i32, i32) {
    %c0_i32 = arith.constant 0 : i32
    %c0_i32_0 = arith.constant 0 : i32
    %c0_i32_1 = arith.constant 0 : i32
    return %c0_i32, %c0_i32_0 : i32, i32
  }
  func.func @transform_7(%arg0: i32) -> (i32, i32) {
    %c0_i32 = arith.constant 0 : i32
    %c0_i32_0 = arith.constant 0 : i32
    %c0_i32_1 = arith.constant 0 : i32
    return %c0_i32, %c0_i32_0 : i32, i32
  }
  func.func @transform_8(%arg0: i32) -> (i32, i32) {
    %c0_i32 = arith.constant 0 : i32
    %c0_i32_0 = arith.constant 0 : i32
    %c0_i32_1 = arith.constant 0 : i32
    return %c0_i32, %c0_i32_0 : i32, i32
  }
  func.func @transform_9(%arg0: i32) -> (i32, i32) {
    %c0_i32 = arith.constant 0 : i32
    %c0_i32_0 = arith.constant 0 : i32
    return %arg0, %c0_i32 : i32, i32
  }
}

</mosaic_0001>

<llo_original>
// kernel: tpu_custom_call.1
$region0: #{tpu_custom_call.1}
  #allocation0 [shape = 'u32[]', space=smem, size = 0x4, offset = 0x4, fixed_abs, tag = 'smem constant byte address 0x4 - core index']
  #allocation1 [shape = 'u32[144,128]{1,0:T(1,128)}', space=vmem, size = 0x12000, scoped, tag = 'internal scratch']
  %s0 = inlined_call_operand.hbm [shape: f32[32,64], index: 0, kind: input, shape index: {}]
  %s1 = inlined_call_operand.vmem [shape: bf16[64,256], index: 1, kind: input, shape index: {}]
  %s2 = inlined_call_operand.vmem [shape: f32[1,256], index: 2, kind: input, shape index: {}]
  %s3 = inlined_call_operand.hbm [shape: bf16[256,128], index: 3, kind: input, shape index: {}]
  %s4 = inlined_call_operand.vmem [shape: f32[1,128], index: 4, kind: input, shape index: {}]
  %s5 = inlined_call_operand.hbm [shape: bf16[128,128], index: 5, kind: input, shape index: {}]
  %s6 = inlined_call_operand.vmem [shape: f32[1,128], index: 6, kind: input, shape index: {}]
  %s7 = inlined_call_operand.vmem [shape: bf16[128,32], index: 7, kind: input, shape index: {}]
  %s8 = inlined_call_operand.vmem [shape: f32[1,32], index: 8, kind: input, shape index: {}]
  %s9 = inlined_call_operand.hbm [shape: f32[32,32], index: 9, kind: output, shape index: {}]
  %s10 = sld [smem:[#allocation0]]
  $region81: #{tpu_custom_call.1} parent=0
    _
  %s12 = ssub.s32 1, %s10
  %s13 = scalar_select 0, %s12, %s10
  $region1: #{tpu_custom_call.1} parent=0
    #allocation2 [shape = 'u8[16384]{0}', space=vmem, size = 0x4000, scoped, tag = 'input window, operand 0']
    #allocation3 [shape = 's32[2]{0}', space=sflag, size = 0x8, scoped, tag = 'scoped memory for tpu_custom_call.1']
    #allocation4 [shape = 's32[2]{0}', space=sflag, size = 0x8, scoped, tag = 'scoped memory for tpu_custom_call.1']
    #allocation5 [shape = 'u8[65536]{0}', space=vmem, size = 0x10000, scoped, tag = 'input window, operand 3, single buffered']
    #allocation6 [shape = 's32[1]{0}', space=sflag, size = 0x4, scoped, tag = 'scoped memory for tpu_custom_call.1']
    #allocation7 [shape = 'u8[32768]{0}', space=vmem, size = 0x8000, scoped, tag = 'input window, operand 5, single buffered']
    #allocation8 [shape = 'u8[16384]{0}', space=vmem, size = 0x4000, scoped, tag = 'output window, operand 0']
    %14 = vsyncpa [#allocation3], 0
    %s15 = scalar_lea.sflag [#allocation3], 1
    %16 = vsyncpa %s15, 0
    %17 = vsyncpa [#allocation6], 0
    %18 = vsyncpa [#allocation4], 0
    %s19 = scalar_lea.sflag [#allocation4], 1
    %20 = vsyncpa %s19, 0
    loop: start=0, step=1, limit=4
    $region2: #{tpu_custom_call.1} parent=1 // loop_pre_header
      _
    $region3: #{tpu_custom_call.1} parent=1 // loop_header
      %s22 = sphi 0, %s26
      %p23 = scmp.ge.s32.totalorder %s22, 4
      %s32 = sphi 0, %s34
      %s35 = sphi 0, %s32
      %s36 = sphi 0, %s35
      %s52 = sphi 0, %s36
      %s56 = sphi 0, %s56
      %s58 = sphi 0, %s56
      %s59 = sphi 0, %s58
      %s73 = sphi 0, %s59
      %s77 = sphi 0, %s77
      %s79 = sphi 0, %s77
      %s80 = sphi 0, %s79
      %s94 = sphi 0, %s80
      %s98 = sphi 0, %s98
      %s100 = sphi 0, %s98
      %s101 = sphi 0, %s100
      %s115 = sphi 0, %s101
      %s119 = sphi 0, %s119
      %s121 = sphi 0, %s119
      %s122 = sphi 0, %s121
      %s136 = sphi 0, %s122
      %s140 = sphi 0, %s140
      %s142 = sphi 0, %s140
      %s143 = sphi 0, %s142
      %s157 = sphi 0, %s143
      %s161 = sphi 0, %s161
      %s163 = sphi 0, %s161
      %s164 = sphi 0, %s163
      %s178 = sphi 0, %s164
      %s182 = sphi 0, %s182
      %s184 = sphi 0, %s182
      %s185 = sphi 0, %s184
      %s199 = sphi 0, %s185
      %s203 = sphi 0, %s203
      %s205 = sphi 0, %s203
      %s206 = sphi 0, %s205
      %s220 = sphi 0, %s206
      %s226 = sphi 0, %s228
      %s229 = sphi 0, %s226
      %s230 = sphi 0, %s229
      %s246 = sphi 0, %s230
    $region4: #{tpu_custom_call.1} parent=1 // loop_header_branch
      %25 = sbr.rel (%p23) target = $region8
    $region5: #{tpu_custom_call.1} parent=1 // loop_body
      %s27 = ssub.s32 %s22, 1
      %s28 = ssub.s32 %s22, 2
      %s29 = sadd.s32 %s22, 1
      %s30 = ssub.s32 %s22, %s29
      %p31 = scmp.eq.s32.totalorder %s30, 0
      %s33 = sadd.s32 %s32, 1
      %s34 = scalar_select %p31, %s32, %s33
      %p37 = pneg %p31
      %p38 = scmp.eq.s32.totalorder %s22, 1
      %p39 = por %p37, %p38
      %p40 = scmp.ne.s32.totalorder %s32, %s35
      %p41 = scmp.eq.s32.totalorder %s22, 0
      %p42 = por %p40, %p41
      %p43 = scmp.ne.s32.totalorder %s32, %s35
      %p44 = scmp.eq.s32.totalorder %s27, 1
      %p45 = por %p43, %p44
      %p46 = scmp.ne.s32.totalorder %s35, %s36
      %p47 = scmp.eq.s32.totalorder %s27, 0
      %p48 = por %p46, %p47
      %p49 = scmp.ne.s32.totalorder %s35, %s36
      %p50 = scmp.eq.s32.totalorder %s28, 1
      %p51 = por %p49, %p50
      %p53 = scmp.ne.s32.totalorder %s36, %s52
      %p54 = scmp.eq.s32.totalorder %s28, 0
      %p55 = por %p53, %p54
      %s57 = sadd.s32 %s56, 1
      %p60 = scmp.eq.s32.totalorder %s22, 1
      %p61 = scmp.ne.s32.totalorder %s56, %s58
      %p62 = scmp.eq.s32.totalorder %s22, 0
      %p63 = por %p61, %p62
      %p64 = scmp.ne.s32.totalorder %s56, %s58
      %p65 = scmp.eq.s32.totalorder %s27, 1
      %p66 = por %p64, %p65
      %p67 = scmp.ne.s32.totalorder %s58, %s59
      %p68 = scmp.eq.s32.totalorder %s27, 0
      %p69 = por %p67, %p68
      %p70 = scmp.ne.s32.totalorder %s58, %s59
      %p71 = scmp.eq.s32.totalorder %s28, 1
      %p72 = por %p70, %p71
      %p74 = scmp.ne.s32.totalorder %s59, %s73
      %p75 = scmp.eq.s32.totalorder %s28, 0
      %p76 = por %p74, %p75
      %s78 = sadd.s32 %s77, 1
      %p81 = scmp.eq.s32.totalorder %s22, 1
      %p82 = scmp.ne.s32.totalorder %s77, %s79
      %p83 = scmp.eq.s32.totalorder %s22, 0
      %p84 = por %p82, %p83
      %p85 = scmp.ne.s32.totalorder %s77, %s79
      %p86 = scmp.eq.s32.totalorder %s27, 1
      %p87 = por %p85, %p86
      %p88 = scmp.ne.s32.totalorder %s79, %s80
      %p89 = scmp.eq.s32.totalorder %s27, 0
      %p90 = por %p88, %p89
      %p91 = scmp.ne.s32.totalorder %s79, %s80
      %p92 = scmp.eq.s32.totalorder %s28, 1
      %p93 = por %p91, %p92
      %p95 = scmp.ne.s32.totalorder %s80, %s94
      %p96 = scmp.eq.s32.totalorder %s28, 0
      %p97 = por %p95, %p96
      %s99 = sadd.s32 %s98, 1
      %p102 = scmp.eq.s32.totalorder %s22, 1
      %p103 = scmp.ne.s32.totalorder %s98, %s100
      %p104 = scmp.eq.s32.totalorder %s22, 0
      %p105 = por %p103, %p104
      %p106 = scmp.ne.s32.totalorder %s98, %s100
      %p107 = scmp.eq.s32.totalorder %s27, 1
      %p108 = por %p106, %p107
      %p109 = scmp.ne.s32.totalorder %s100, %s101
      %p110 = scmp.eq.s32.totalorder %s27, 0
      %p111 = por %p109, %p110
      %p112 = scmp.ne.s32.totalorder %s100, %s101
      %p113 = scmp.eq.s32.totalorder %s28, 1
      %p114 = por %p112, %p113
      %p116 = scmp.ne.s32.totalorder %s101, %s115
      %p117 = scmp.eq.s32.totalorder %s28, 0
      %p118 = por %p116, %p117
      %s120 = sadd.s32 %s119, 1
      %p123 = scmp.eq.s32.totalorder %s22, 1
      %p124 = scmp.ne.s32.totalorder %s119, %s121
      %p125 = scmp.eq.s32.totalorder %s22, 0
      %p126 = por %p124, %p125
      %p127 = scmp.ne.s32.totalorder %s119, %s121
      %p128 = scmp.eq.s32.totalorder %s27, 1
      %p129 = por %p127, %p128
      %p130 = scmp.ne.s32.totalorder %s121, %s122
      %p131 = scmp.eq.s32.totalorder %s27, 0
      %p132 = por %p130, %p131
      %p133 = scmp.ne.s32.totalorder %s121, %s122
      %p134 = scmp.eq.s32.totalorder %s28, 1
      %p135 = por %p133, %p134
      %p137 = scmp.ne.s32.totalorder %s122, %s136
      %p138 = scmp.eq.s32.totalorder %s28, 0
      %p139 = por %p137, %p138
      %s141 = sadd.s32 %s140, 1
      %p144 = scmp.eq.s32.totalorder %s22, 1
      %p145 = scmp.ne.s32.totalorder %s140, %s142
      %p146 = scmp.eq.s32.totalorder %s22, 0
      %p147 = por %p145, %p146
      %p148 = scmp.ne.s32.totalorder %s140, %s142
      %p149 = scmp.eq.s32.totalorder %s27, 1
      %p150 = por %p148, %p149
      %p151 = scmp.ne.s32.totalorder %s142, %s143
      %p152 = scmp.eq.s32.totalorder %s27, 0
      %p153 = por %p151, %p152
      %p154 = scmp.ne.s32.totalorder %s142, %s143
      %p155 = scmp.eq.s32.totalorder %s28, 1
      %p156 = por %p154, %p155
      %p158 = scmp.ne.s32.totalorder %s143, %s157
      %p159 = scmp.eq.s32.totalorder %s28, 0
      %p160 = por %p158, %p159
      %s162 = sadd.s32 %s161, 1
      %p165 = scmp.eq.s32.totalorder %s22, 1
      %p166 = scmp.ne.s32.totalorder %s161, %s163
      %p167 = scmp.eq.s32.totalorder %s22, 0
      %p168 = por %p166, %p167
      %p169 = scmp.ne.s32.totalorder %s161, %s163
      %p170 = scmp.eq.s32.totalorder %s27, 1
      %p171 = por %p169, %p170
      %p172 = scmp.ne.s32.totalorder %s163, %s164
      %p173 = scmp.eq.s32.totalorder %s27, 0
      %p174 = por %p172, %p173
      %p175 = scmp.ne.s32.totalorder %s163, %s164
      %p176 = scmp.eq.s32.totalorder %s28, 1
      %p177 = por %p175, %p176
      %p179 = scmp.ne.s32.totalorder %s164, %s178
      %p180 = scmp.eq.s32.totalorder %s28, 0
      %p181 = por %p179, %p180
      %s183 = sadd.s32 %s182, 1
      %p186 = scmp.eq.s32.totalorder %s22, 1
      %p187 = scmp.ne.s32.totalorder %s182, %s184
      %p188 = scmp.eq.s32.totalorder %s22, 0
      %p189 = por %p187, %p188
      %p190 = scmp.ne.s32.totalorder %s182, %s184
      %p191 = scmp.eq.s32.totalorder %s27, 1
      %p192 = por %p190, %p191
      %p193 = scmp.ne.s32.totalorder %s184, %s185
      %p194 = scmp.eq.s32.totalorder %s27, 0
      %p195 = por %p193, %p194
      %p196 = scmp.ne.s32.totalorder %s184, %s185
      %p197 = scmp.eq.s32.totalorder %s28, 1
      %p198 = por %p196, %p197
      %p200 = scmp.ne.s32.totalorder %s185, %s199
      %p201 = scmp.eq.s32.totalorder %s28, 0
      %p202 = por %p200, %p201
      %s204 = sadd.s32 %s203, 1
      %p207 = scmp.eq.s32.totalorder %s22, 1
      %p208 = scmp.ne.s32.totalorder %s203, %s205
      %p209 = scmp.eq.s32.totalorder %s22, 0
      %p210 = por %p208, %p209
      %p211 = scmp.ne.s32.totalorder %s203, %s205
      %p212 = scmp.eq.s32.totalorder %s27, 1
      %p213 = por %p211, %p212
      %p214 = scmp.ne.s32.totalorder %s205, %s206
      %p215 = scmp.eq.s32.totalorder %s27, 0
      %p216 = por %p214, %p215
      %p217 = scmp.ne.s32.totalorder %s205, %s206
      %p218 = scmp.eq.s32.totalorder %s28, 1
      %p219 = por %p217, %p218
      %p221 = scmp.ne.s32.totalorder %s206, %s220
      %p222 = scmp.eq.s32.totalorder %s28, 0
      %p223 = por %p221, %p222
      %s224 = ssub.s32 %s22, %s29
      %p225 = scmp.eq.s32.totalorder %s224, 0
      %s227 = sadd.s32 %s226, 1
      %s228 = scalar_select %p225, %s226, %s227
      %p231 = pneg %p225
      %p232 = scmp.eq.s32.totalorder %s22, 1
      %p233 = por %p231, %p232
      %p234 = scmp.ne.s32.totalorder %s226, %s229
      %p235 = scmp.eq.s32.totalorder %s22, 0
      %p236 = por %p234, %p235
      %p237 = scmp.ne.s32.totalorder %s226, %s229
      %p238 = scmp.eq.s32.totalorder %s27, 1
      %p239 = por %p237, %p238
      %p240 = scmp.ne.s32.totalorder %s229, %s230
      %p241 = scmp.eq.s32.totalorder %s27, 0
      %p242 = por %p240, %p241
      %p243 = scmp.ne.s32.totalorder %s229, %s230
      %p244 = scmp.eq.s32.totalorder %s28, 1
      %p245 = por %p243, %p244
      %p247 = scmp.ne.s32.totalorder %s230, %s246
      %p248 = scmp.eq.s32.totalorder %s28, 0
      %p249 = por %p247, %p248
      %p250 = scmp.le.s32.totalorder 1, %s22
      %p251 = scmp.lt.s32.totalorder %s22, 3
      %p252 = pnand %p250, %p251
      %p253 = pneg %p252
      // Predicated region
      $region9: #{tpu_custom_call.1} parent=5 // pred_check
        _
      $region10: #{tpu_custom_call.1} parent=5 // pred_check_branch
        %255 = sbr.rel (%p252) target = $region12
      $region11: #{tpu_custom_call.1} parent=5 // pred_region
        %s256 = ssub.s32 %s22, 1
        // Predicated region
        $region13: #{tpu_custom_call.1} parent=11 // pred_check
          %p257 = pneg %p69
        $region14: #{tpu_custom_call.1} parent=11 // pred_check_branch
          %259 = sbr.rel (%p257) target = $region16
        $region15: #{tpu_custom_call.1} parent=11 // pred_region
          _
        $region16: #{tpu_custom_call.1} parent=11 // pred_fallthru
          _
        // Predicated region
        $region17: #{tpu_custom_call.1} parent=11 // pred_check
          %p260 = pneg %p90
        $region18: #{tpu_custom_call.1} parent=11 // pred_check_branch
          %262 = sbr.rel (%p260) target = $region20
        $region19: #{tpu_custom_call.1} parent=11 // pred_region
          _
        $region20: #{tpu_custom_call.1} parent=11 // pred_fallthru
          _
        // Predicated region
        $region21: #{tpu_custom_call.1} parent=11 // pred_check
          %p263 = pneg %p111
        $region22: #{tpu_custom_call.1} parent=11 // pred_check_branch
          %265 = sbr.rel (%p263) target = $region24
        $region23: #{tpu_custom_call.1} parent=11 // pred_region
          %s267 = ssub.s32 2048, 2048
          %268 = vsyncadd [#allocation6], %s267
          %s269 = sshll.u32 [#allocation5], 4
          %s270 = int_to_ptr.vmem [resolvable:$true] %s269
          %275 = dma.hbm_to_vmem [thread:$0]  %s3, 2048, %s270, [#allocation6], 64, 64, 4
        $region24: #{tpu_custom_call.1} parent=11 // pred_fallthru
          _
        // Predicated region
        $region25: #{tpu_custom_call.1} parent=11 // pred_check
          %p276 = pneg %p132
        $region26: #{tpu_custom_call.1} parent=11 // pred_check_branch
          %278 = sbr.rel (%p276) target = $region28
        $region27: #{tpu_custom_call.1} parent=11 // pred_region
          _
        $region28: #{tpu_custom_call.1} parent=11 // pred_fallthru
          _
        // Predicated region
        $region29: #{tpu_custom_call.1} parent=11 // pred_check
          %p279 = pneg %p153
        $region30: #{tpu_custom_call.1} parent=11 // pred_check_branch
          %281 = sbr.rel (%p279) target = $region32
        $region31: #{tpu_custom_call.1} parent=11 // pred_region
          %s283 = ssub.s32 1024, 1024
          %284 = vsyncadd [#allocation6], %s283
          %s285 = sshll.u32 [#allocation7], 4
          %s286 = int_to_ptr.vmem [resolvable:$true] %s285
          %291 = dma.hbm_to_vmem [thread:$0]  %s5, 1024, %s286, [#allocation6], 64, 64, 4
        $region32: #{tpu_custom_call.1} parent=11 // pred_fallthru
          _
        // Predicated region
        $region33: #{tpu_custom_call.1} parent=11 // pred_check
          %p292 = pneg %p174
        $region34: #{tpu_custom_call.1} parent=11 // pred_check_branch
          %294 = sbr.rel (%p292) target = $region36
        $region35: #{tpu_custom_call.1} parent=11 // pred_region
          _
        $region36: #{tpu_custom_call.1} parent=11 // pred_fallthru
          _
        // Predicated region
        $region37: #{tpu_custom_call.1} parent=11 // pred_check
          %p295 = pneg %p195
        $region38: #{tpu_custom_call.1} parent=11 // pred_check_branch
          %297 = sbr.rel (%p295) target = $region40
        $region39: #{tpu_custom_call.1} parent=11 // pred_region
          _
        $region40: #{tpu_custom_call.1} parent=11 // pred_fallthru
          _
        // Predicated region
        $region41: #{tpu_custom_call.1} parent=11 // pred_check
          %p298 = pneg %p216
        $region42: #{tpu_custom_call.1} parent=11 // pred_check_branch
          %300 = sbr.rel (%p298) target = $region44
        $region43: #{tpu_custom_call.1} parent=11 // pred_region
          _
        $region44: #{tpu_custom_call.1} parent=11 // pred_fallthru
          _
      $region12: #{tpu_custom_call.1} parent=5 // pred_fallthru
        _
      %p301 = scmp.lt.s32.totalorder %s22, 2
      // Predicated region
      $region45: #{tpu_custom_call.1} parent=5 // pred_check
        %p302 = pneg %p301
      $region46: #{tpu_custom_call.1} parent=5 // pred_check_branch
        %304 = sbr.rel (%p302) target = $region48
      $region47: #{tpu_custom_call.1} parent=5 // pred_region
        // Predicated region
        $region49: #{tpu_custom_call.1} parent=47 // pred_check
          %p305 = pneg %p42
        $region50: #{tpu_custom_call.1} parent=47 // pred_check_branch
          %307 = sbr.rel (%p305) target = $region52
        $region51: #{tpu_custom_call.1} parent=47 // pred_region
          %s308 = sand.u32 %s32, 1
          %s309 = scalar_lea.sflag [#allocation3], %s308
          %s310 = sand.u32 %s32, 1
          %s311 = smul.addr %s310, 16
          %s312 = scalar_lea.vmem [#allocation2], %s311
          %s313 = smul.u32 2, %s22
          %s315 = ssub.s32 256, 256
          %316 = vsyncadd %s309, %s315
          %s317 = smul.addr %s313, 128
          %s318 = scalar_lea.hbm %s0, %s317
          %s319 = sshll.u32 %s312, 4
          %s320 = int_to_ptr.vmem [resolvable:$true] %s319
          %325 = dma.hbm_to_vmem [thread:$0]  %s318, 256, %s320, %s309, 128, 128, 8
        $region52: #{tpu_custom_call.1} parent=47 // pred_fallthru
          _
      $region48: #{tpu_custom_call.1} parent=5 // pred_fallthru
        _
      %p326 = scmp.le.s32.totalorder 1, %s22
      %p327 = scmp.lt.s32.totalorder %s22, 3
      %p328 = pnand %p326, %p327
      %p329 = pneg %p328
      // Predicated region
      $region53: #{tpu_custom_call.1} parent=5 // pred_check
        _
      $region54: #{tpu_custom_call.1} parent=5 // pred_check_branch
        %331 = sbr.rel (%p328) target = $region56
      $region55: #{tpu_custom_call.1} parent=5 // pred_region
        %s332 = ssub.s32 %s22, 1
        %s333 = sand.u32 %s35, 1
        %s334 = scalar_lea.sflag [#allocation3], %s333
        %s335 = sand.u32 %s35, 1
        %s336 = smul.addr %s335, 16
        %s337 = scalar_lea.vmem [#allocation2], %s336
        // Predicated region
        $region57: #{tpu_custom_call.1} parent=55 // pred_check
          %p338 = pneg %p48
        $region58: #{tpu_custom_call.1} parent=55 // pred_check_branch
          %340 = sbr.rel (%p338) target = $region60
        $region59: #{tpu_custom_call.1} parent=55 // pred_region
          %341 = dma.done %s334, 256
        $region60: #{tpu_custom_call.1} parent=55 // pred_fallthru
          _
        // Predicated region
        $region61: #{tpu_custom_call.1} parent=55 // pred_check
          %p342 = pneg %p111
        $region62: #{tpu_custom_call.1} parent=55 // pred_check_branch
          %344 = sbr.rel (%p342) target = $region64
        $region63: #{tpu_custom_call.1} parent=55 // pred_region
          %345 = dma.done [#allocation6], 2048
        $region64: #{tpu_custom_call.1} parent=55 // pred_fallthru
          _
        // Predicated region
        $region65: #{tpu_custom_call.1} parent=55 // pred_check
          %p346 = pneg %p153
        $region66: #{tpu_custom_call.1} parent=55 // pred_check_branch
          %348 = sbr.rel (%p346) target = $region68
        $region67: #{tpu_custom_call.1} parent=55 // pred_region
          %349 = dma.done [#allocation6], 1024
        $region68: #{tpu_custom_call.1} parent=55 // pred_fallthru
          _
        %s350 = sand.u32 %s35, 1
        %s351 = scalar_lea.sflag [#allocation3], %s350
        %s352 = sand.u32 %s35, 1
        %s353 = smul.addr %s352, 16
        %s354 = scalar_lea.vmem [#allocation2], %s353
        %p355 = pneg %p48
        %p356 = pneg %p45
        %p357 = pneg %p69
        %p358 = pneg %p66
        %p359 = pneg %p90
        %p360 = pneg %p87
        %p361 = pneg %p111
        %p362 = pneg %p108
        %p363 = pneg %p132
        %p364 = pneg %p129
        %p365 = pneg %p153
        %p366 = pneg %p150
        %p367 = pneg %p174
        %p368 = pneg %p171
        %p369 = pneg %p195
        %p370 = pneg %p192
        %p371 = pneg %p216
        %p372 = pneg %p213
        %p373 = pneg %p242
        %p374 = pneg %p239
        %s375 = sand.u32 %s229, 1
        %s376 = scalar_lea.sflag [#allocation4], %s375
        %s377 = sand.u32 %s229, 1
        %s378 = smul.addr %s377, 16
        %s379 = scalar_lea.vmem [#allocation8], %s378
        %s380 = smul.u32 2, %s27
        %s381 = smul.u32 2, %s27
        %v383 = vld [vmem:[%s337] sm:$0xff]
        %v384 = vld [vmem:[%s337 + $0x8] sm:$0xff]
        %v385 = vpack.c.bf16 %v384, %v383
        %v386 = vld [vmem:[%s1] sm:$0xff]
        %v387 = vld [vmem:[%s1 + $0x8] sm:$0xff]
        %v388 = vld [vmem:[%s1 + $0x10] sm:$0xff]
        %v389 = vld [vmem:[%s1 + $0x18] sm:$0xff]
        %v390 = vld [vmem:[%s1 + $0x20] sm:$0xff]
        %v391 = vld [vmem:[%s1 + $0x28] sm:$0xff]
        %v392 = vld [vmem:[%s1 + $0x30] sm:$0xff]
        %v393 = vld [vmem:[%s1 + $0x38] sm:$0xff]
        %v394 = vld [vmem:[%s2] sm:$0x3]
        %v396 = vlaneseq
        %v397 = vshrl.u32 %v396, 7
        %v398 = vsub.s32 0, %v397
        %v399 = vrot.slane %v394, %v398
        %v400 = vlaneseq
        %v401 = vshrl.u32 %v400, 7
        %v402 = vsub.s32 1, %v401
        %v403 = vrot.slane %v394, %v402
        %v414 = vunpack.c.l.b16 %v386
        %v415 = vunpack.c.h.b16 %v386
        %v416 = vunpack.c.l.b16 %v387
        %v417 = vunpack.c.h.b16 %v387
        %v418 = vunpack.c.l.b16 %v388
        %v419 = vunpack.c.h.b16 %v388
        %v420 = vunpack.c.l.b16 %v389
        %v421 = vunpack.c.h.b16 %v389
        %v422 = vunpack.c.l.b16 %v390
        %v423 = vunpack.c.h.b16 %v390
        %v424 = vunpack.c.l.b16 %v391
        %v425 = vunpack.c.h.b16 %v391
        %v426 = vunpack.c.l.b16 %v392
        %v427 = vunpack.c.h.b16 %v392
        %v428 = vunpack.c.l.b16 %v393
        %v429 = vunpack.c.h.b16 %v393
        %v430 = vpack.c.b16 %v416, %v414
        %v431 = vpack.c.b16 %v417, %v415
        %v432 = vpack.c.b16 %v420, %v418
        %v433 = vpack.c.b16 %v421, %v419
        %v434 = vpack.c.b16 %v424, %v422
        %v435 = vpack.c.b16 %v425, %v423
        %v436 = vpack.c.b16 %v428, %v426
        %v437 = vpack.c.b16 %v429, %v427
        %vm446 = vcmask 523264
        %v448 = vsel %vm446, %v385, 0
        %450 = vmatprep.subr.bf16.mxu0 %v431
        %451 = vmatpush1.bf16.msra.mxu0 %v430
        %452 = vmatprep.subr.bf16.mxu0 %v433
        %453 = vmatpush1.bf16.msra.mxu0 %v432
        %454 = vmatprep.subr.bf16.mxu0 %v435
        %455 = vmatpush1.bf16.msra.mxu0 %v434
        %456 = vmatprep.subr.bf16.mxu0 %v437
        %457 = vmatpush1.bf16.msra.mxu0 %v436
        %458 = vmatprep.subr.bf16.mxu0 0
        %459 = vmatpush1.bf16.msra.mxu0 0
        %460 = vmatprep.subr.bf16.mxu0 0
        %461 = vmatpush1.bf16.msra.mxu0 0
        %462 = vmatprep.subr.bf16.mxu0 0
        %463 = vmatpush1.bf16.msra.mxu0 0
        %464 = vmatprep.subr.bf16.mxu0 0
        %465 = vmatpush1.bf16.msra.mxu0 0
        %466 = vmatprep.subr.bf16.mxu0 0
        %467 = vmatpush1.bf16.msra.mxu0 0
        %468 = vmatprep.subr.bf16.mxu0 0
        %469 = vmatpush1.bf16.msra.mxu0 0
        %470 = vmatprep.subr.bf16.mxu0 0
        %471 = vmatpush1.bf16.msra.mxu0 0
        %472 = vmatprep.subr.bf16.mxu0 0
        %473 = vmatpush1.bf16.msra.mxu0 0
        %474 = vmatprep.subr.bf16.mxu0 0
        %475 = vmatpush1.bf16.msra.mxu0 0
        %476 = vmatprep.subr.bf16.mxu0 0
        %477 = vmatpush1.bf16.msra.mxu0 0
        %478 = vmatprep.subr.bf16.mxu0 0
        %479 = vmatpush1.bf16.msra.mxu0 0
        %480 = vmatprep.subr.bf16.mxu0 0
        %481 = vmatpush1.bf16.msra.mxu0 0
        %482 = vmatprep.mubr.bf16.mxu0 0
        %483 = vmatmul.mubr.bf16.gmra.mrb[0].mxu0 %v448
        %v484 = vpop.f32.mrb[0].mxu0
        %v485 = vadd.f32 %v399, %v484
        %v486 = vpop.f32.mrb[0].mxu0
        %v487 = vadd.f32 %v403, %v486
        %v488 = vpop.f32.mrb[0].mxu0
        %v489 = vadd.f32 %v399, %v488
        %v490 = vpop.f32.mrb[0].mxu0
        %v491 = vadd.f32 %v403, %v490
        %492 = vdwg.mxu0
        %v493 = vtanh.pop %v485
        %v494 = vtanh.pop %v487
        %v495 = vtanh.pop %v489
        %v496 = vtanh.pop %v491
        %v497 = vpack.c.bf16 %v495, %v493
        %v498 = vpack.c.bf16 %v496, %v494
        %v499 = vld [vmem:[#allocation5] sm:$0xf]
        %v500 = vld [vmem:[#allocation5 + $0x4] sm:$0xf]
        %v501 = vld [vmem:[#allocation5 + $0x8] sm:$0xf]
        %v502 = vld [vmem:[#allocation5 + $0xc] sm:$0xf]
        %v503 = vld [vmem:[#allocation5 + $0x10] sm:$0xf]
        %v504 = vld [vmem:[#allocation5 + $0x14] sm:$0xf]
        %v505 = vld [vmem:[#allocation5 + $0x18] sm:$0xf]
        %v506 = vld [vmem:[#allocation5 + $0x1c] sm:$0xf]
        %v507 = vld [vmem:[#allocation5 + $0x20] sm:$0xf]
        %v508 = vld [vmem:[#allocation5 + $0x24] sm:$0xf]
        %v509 = vld [vmem:[#allocation5 + $0x28] sm:$0xf]
        %v510 = vld [vmem:[#allocation5 + $0x2c] sm:$0xf]
        %v511 = vld [vmem:[#allocation5 + $0x30] sm:$0xf]
        %v512 = vld [vmem:[#allocation5 + $0x34] sm:$0xf]
        %v513 = vld [vmem:[#allocation5 + $0x38] sm:$0xf]
        %v514 = vld [vmem:[#allocation5 + $0x3c] sm:$0xf]
        %v515 = vld [vmem:[#allocation5 + $0x40] sm:$0xf]
        %v516 = vld [vmem:[#allocation5 + $0x44] sm:$0xf]
        %v517 = vld [vmem:[#allocation5 + $0x48] sm:$0xf]
        %v518 = vld [vmem:[#allocation5 + $0x4c] sm:$0xf]
        %v519 = vld [vmem:[#allocation5 + $0x50] sm:$0xf]
        %v520 = vld [vmem:[#allocation5 + $0x54] sm:$0xf]
        %v521 = vld [vmem:[#allocation5 + $0x58] sm:$0xf]
        %v522 = vld [vmem:[#allocation5 + $0x5c] sm:$0xf]
        %v523 = vld [vmem:[#allocation5 + $0x60] sm:$0xf]
        %v524 = vld [vmem:[#allocation5 + $0x64] sm:$0xf]
        %v525 = vld [vmem:[#allocation5 + $0x68] sm:$0xf]
        %v526 = vld [vmem:[#allocation5 + $0x6c] sm:$0xf]
        %v527 = vld [vmem:[#allocation5 + $0x70] sm:$0xf]
        %v528 = vld [vmem:[#allocation5 + $0x74] sm:$0xf]
        %v529 = vld [vmem:[#allocation5 + $0x78] sm:$0xf]
        %v530 = vld [vmem:[#allocation5 + $0x7c] sm:$0xf]
        %v531 = vld [vmem:[%s4] sm:$0x1]
        %v533 = vlaneseq
        %v534 = vshrl.u32 %v533, 7
        %v535 = vsub.s32 0, %v534
        %v536 = vrot.slane %v531, %v535
        %v570 = vunpack.c.l.b16 %v499
        %v571 = vunpack.c.l.b16 %v500
        %v572 = vunpack.c.l.b16 %v501
        %v573 = vunpack.c.l.b16 %v502
        %v574 = vunpack.c.l.b16 %v503
        %v575 = vunpack.c.l.b16 %v504
        %v576 = vunpack.c.l.b16 %v505
        %v577 = vunpack.c.l.b16 %v506
        %v578 = vunpack.c.l.b16 %v507
        %v579 = vunpack.c.l.b16 %v508
        %v580 = vunpack.c.l.b16 %v509
        %v581 = vunpack.c.l.b16 %v510
        %v582 = vunpack.c.l.b16 %v511
        %v583 = vunpack.c.l.b16 %v512
        %v584 = vunpack.c.l.b16 %v513
        %v585 = vunpack.c.l.b16 %v514
        %v586 = vunpack.c.l.b16 %v515
        %v587 = vunpack.c.l.b16 %v516
        %v588 = vunpack.c.l.b16 %v517
        %v589 = vunpack.c.l.b16 %v518
        %v590 = vunpack.c.l.b16 %v519
        %v591 = vunpack.c.l.b16 %v520
        %v592 = vunpack.c.l.b16 %v521
        %v593 = vunpack.c.l.b16 %v522
        %v594 = vunpack.c.l.b16 %v523
        %v595 = vunpack.c.l.b16 %v524
        %v596 = vunpack.c.l.b16 %v525
        %v597 = vunpack.c.l.b16 %v526
        %v598 = vunpack.c.l.b16 %v527
        %v599 = vunpack.c.l.b16 %v528
        %v600 = vunpack.c.l.b16 %v529
        %v601 = vunpack.c.l.b16 %v530
        %v602 = vpack.c.b16 %v571, %v570
        %v603 = vpack.c.b16 %v573, %v572
        %v604 = vpack.c.b16 %v575, %v574
        %v605 = vpack.c.b16 %v577, %v576
        %v606 = vpack.c.b16 %v579, %v578
        %v607 = vpack.c.b16 %v581, %v580
        %v608 = vpack.c.b16 %v583, %v582
        %v609 = vpack.c.b16 %v585, %v584
        %v610 = vpack.c.b16 %v587, %v586
        %v611 = vpack.c.b16 %v589, %v588
        %v612 = vpack.c.b16 %v591, %v590
        %v613 = vpack.c.b16 %v593, %v592
        %v614 = vpack.c.b16 %v595, %v594
        %v615 = vpack.c.b16 %v597, %v596
        %v616 = vpack.c.b16 %v599, %v598
        %v617 = vpack.c.b16 %v601, %v600
        %634 = vmatprep.subr.bf16.mxu0 0
        %635 = vmatpush1.bf16.msra.mxu0 %v602
        %636 = vmatprep.subr.bf16.mxu0 0
        %637 = vmatpush1.bf16.msra.mxu0 %v603
        %638 = vmatprep.subr.bf16.mxu0 0
        %639 = vmatpush1.bf16.msra.mxu0 %v604
        %640 = vmatprep.subr.bf16.mxu0 0
        %641 = vmatpush1.bf16.msra.mxu0 %v605
        %642 = vmatprep.subr.bf16.mxu0 0
        %643 = vmatpush1.bf16.msra.mxu0 %v606
        %644 = vmatprep.subr.bf16.mxu0 0
        %645 = vmatpush1.bf16.msra.mxu0 %v607
        %646 = vmatprep.subr.bf16.mxu0 0
        %647 = vmatpush1.bf16.msra.mxu0 %v608
        %648 = vmatprep.subr.bf16.mxu0 0
        %649 = vmatpush1.bf16.msra.mxu0 %v609
        %650 = vmatprep.subr.bf16.mxu0 0
        %651 = vmatpush1.bf16.msra.mxu0 %v610
        %652 = vmatprep.subr.bf16.mxu0 0
        %653 = vmatpush1.bf16.msra.mxu0 %v611
        %654 = vmatprep.subr.bf16.mxu0 0
        %655 = vmatpush1.bf16.msra.mxu0 %v612
        %656 = vmatprep.subr.bf16.mxu0 0
        %657 = vmatpush1.bf16.msra.mxu0 %v613
        %658 = vmatprep.subr.bf16.mxu0 0
        %659 = vmatpush1.bf16.msra.mxu0 %v614
        %660 = vmatprep.subr.bf16.mxu0 0
        %661 = vmatpush1.bf16.msra.mxu0 %v615
        %662 = vmatprep.subr.bf16.mxu0 0
        %663 = vmatpush1.bf16.msra.mxu0 %v616
        %664 = vmatprep.subr.bf16.mxu0 0
        %665 = vmatpush1.bf16.msra.mxu0 %v617
        %666 = vmatprep.mubr.bf16.mxu0 %v498
        %667 = vmatmul.mubr.bf16.gmra.mrb[0].mxu0 %v497
        %v668 = vpop.f32.mrb[0].mxu0
        %v669 = vadd.f32 %v536, %v668
        %v670 = vpop.f32.mrb[0].mxu0
        %v671 = vpop.f32.mrb[0].mxu0
        %v672 = vadd.f32 %v536, %v671
        %v673 = vpop.f32.mrb[0].mxu0
        %674 = vdwg.mxu0
        %v675 = vtanh.pop %v669
        %v676 = vtanh.pop %v672
        %v677 = vpack.c.bf16 %v676, %v675
        %v678 = vld [vmem:[#allocation7] sm:$0xf]
        %v679 = vld [vmem:[#allocation7 + $0x4] sm:$0xf]
        %v680 = vld [vmem:[#allocation7 + $0x8] sm:$0xf]
        %v681 = vld [vmem:[#allocation7 + $0xc] sm:$0xf]
        %v682 = vld [vmem:[#allocation7 + $0x10] sm:$0xf]
        %v683 = vld [vmem:[#allocation7 + $0x14] sm:$0xf]
        %v684 = vld [vmem:[#allocation7 + $0x18] sm:$0xf]
        %v685 = vld [vmem:[#allocation7 + $0x1c] sm:$0xf]
        %v686 = vld [vmem:[#allocation7 + $0x20] sm:$0xf]
        %v687 = vld [vmem:[#allocation7 + $0x24] sm:$0xf]
        %v688 = vld [vmem:[#allocation7 + $0x28] sm:$0xf]
        %v689 = vld [vmem:[#allocation7 + $0x2c] sm:$0xf]
        %v690 = vld [vmem:[#allocation7 + $0x30] sm:$0xf]
        %v691 = vld [vmem:[#allocation7 + $0x34] sm:$0xf]
        %v692 = vld [vmem:[#allocation7 + $0x38] sm:$0xf]
        %v693 = vld [vmem:[#allocation7 + $0x3c] sm:$0xf]
        %v694 = vld [vmem:[%s6] sm:$0x1]
        %v696 = vlaneseq
        %v697 = vshrl.u32 %v696, 7
        %v698 = vsub.s32 0, %v697
        %v699 = vrot.slane %v694, %v698
        %v717 = vunpack.c.l.b16 %v678
        %v718 = vunpack.c.l.b16 %v679
        %v719 = vunpack.c.l.b16 %v680
        %v720 = vunpack.c.l.b16 %v681
        %v721 = vunpack.c.l.b16 %v682
        %v722 = vunpack.c.l.b16 %v683
        %v723 = vunpack.c.l.b16 %v684
        %v724 = vunpack.c.l.b16 %v685
        %v725 = vunpack.c.l.b16 %v686
        %v726 = vunpack.c.l.b16 %v687
        %v727 = vunpack.c.l.b16 %v688
        %v728 = vunpack.c.l.b16 %v689
        %v729 = vunpack.c.l.b16 %v690
        %v730 = vunpack.c.l.b16 %v691
        %v731 = vunpack.c.l.b16 %v692
        %v732 = vunpack.c.l.b16 %v693
        %v733 = vpack.c.b16 %v718, %v717
        %v734 = vpack.c.b16 %v720, %v719
        %v735 = vpack.c.b16 %v722, %v721
        %v736 = vpack.c.b16 %v724, %v723
        %v737 = vpack.c.b16 %v726, %v725
        %v738 = vpack.c.b16 %v728, %v727
        %v739 = vpack.c.b16 %v730, %v729
        %v740 = vpack.c.b16 %v732, %v731
        %749 = vmatprep.subr.bf16.mxu0 0
        %750 = vmatpush1.bf16.msra.mxu0 %v733
        %751 = vmatprep.subr.bf16.mxu0 0
        %752 = vmatpush1.bf16.msra.mxu0 %v734
        %753 = vmatprep.subr.bf16.mxu0 0
        %754 = vmatpush1.bf16.msra.mxu0 %v735
        %755 = vmatprep.subr.bf16.mxu0 0
        %756 = vmatpush1.bf16.msra.mxu0 %v736
        %757 = vmatprep.subr.bf16.mxu0 0
        %758 = vmatpush1.bf16.msra.mxu0 %v737
        %759 = vmatprep.subr.bf16.mxu0 0
        %760 = vmatpush1.bf16.msra.mxu0 %v738
        %761 = vmatprep.subr.bf16.mxu0 0
        %762 = vmatpush1.bf16.msra.mxu0 %v739
        %763 = vmatprep.subr.bf16.mxu0 0
        %764 = vmatpush1.bf16.msra.mxu0 %v740
        %765 = vmatprep.subr.bf16.mxu0 0
        %766 = vmatpush1.bf16.msra.mxu0 0
        %767 = vmatprep.subr.bf16.mxu0 0
        %768 = vmatpush1.bf16.msra.mxu0 0
        %769 = vmatprep.subr.bf16.mxu0 0
        %770 = vmatpush1.bf16.msra.mxu0 0
        %771 = vmatprep.subr.bf16.mxu0 0
        %772 = vmatpush1.bf16.msra.mxu0 0
        %773 = vmatprep.subr.bf16.mxu0 0
        %774 = vmatpush1.bf16.msra.mxu0 0
        %775 = vmatprep.subr.bf16.mxu0 0
        %776 = vmatpush1.bf16.msra.mxu0 0
        %777 = vmatprep.subr.bf16.mxu0 0
        %778 = vmatpush1.bf16.msra.mxu0 0
        %779 = vmatprep.subr.bf16.mxu0 0
        %780 = vmatpush1.bf16.msra.mxu0 0
        %781 = vmatprep.mubr.bf16.mxu0 0
        %782 = vmatmul.mubr.bf16.gmra.mrb[0].mxu0 %v677
        %v783 = vpop.f32.mrb[0].mxu0
        %v784 = vadd.f32 %v699, %v783
        %v785 = vpop.f32.mrb[0].mxu0
        %v786 = vpop.f32.mrb[0].mxu0
        %v787 = vadd.f32 %v699, %v786
        %v788 = vpop.f32.mrb[0].mxu0
        %789 = vdwg.mxu0
        %v790 = vtanh.pop %v784
        %v791 = vtanh.pop %v787
        %v792 = vpack.c.bf16 %v791, %v790
        %v793 = vld [vmem:[%s7] sm:$0xf]
        %v794 = vld [vmem:[%s7 + $0x4] sm:$0xf]
        %v795 = vld [vmem:[%s7 + $0x8] sm:$0xf]
        %v796 = vld [vmem:[%s7 + $0xc] sm:$0xf]
        %v797 = vld [vmem:[%s7 + $0x10] sm:$0xf]
        %v798 = vld [vmem:[%s7 + $0x14] sm:$0xf]
        %v799 = vld [vmem:[%s7 + $0x18] sm:$0xf]
        %v800 = vld [vmem:[%s7 + $0x1c] sm:$0xf]
        %v801 = vld [vmem:[%s7 + $0x20] sm:$0xf]
        %v802 = vld [vmem:[%s7 + $0x24] sm:$0xf]
        %v803 = vld [vmem:[%s7 + $0x28] sm:$0xf]
        %v804 = vld [vmem:[%s7 + $0x2c] sm:$0xf]
        %v805 = vld [vmem:[%s7 + $0x30] sm:$0xf]
        %v806 = vld [vmem:[%s7 + $0x34] sm:$0xf]
        %v807 = vld [vmem:[%s7 + $0x38] sm:$0xf]
        %v808 = vld [vmem:[%s7 + $0x3c] sm:$0xf]
        %v809 = vld [vmem:[%s8] sm:$0x1]
        %v811 = vlaneseq
        %v812 = vshrl.u32 %v811, 7
        %v813 = vsub.s32 0, %v812
        %v814 = vrot.slane %v809, %v813
        %v832 = vunpack.c.l.b16 %v793
        %v833 = vunpack.c.l.b16 %v794
        %v834 = vunpack.c.l.b16 %v795
        %v835 = vunpack.c.l.b16 %v796
        %v836 = vunpack.c.l.b16 %v797
        %v837 = vunpack.c.l.b16 %v798
        %v838 = vunpack.c.l.b16 %v799
        %v839 = vunpack.c.l.b16 %v800
        %v840 = vunpack.c.l.b16 %v801
        %v841 = vunpack.c.l.b16 %v802
        %v842 = vunpack.c.l.b16 %v803
        %v843 = vunpack.c.l.b16 %v804
        %v844 = vunpack.c.l.b16 %v805
        %v845 = vunpack.c.l.b16 %v806
        %v846 = vunpack.c.l.b16 %v807
        %v847 = vunpack.c.l.b16 %v808
        %v848 = vpack.c.b16 %v833, %v832
        %v849 = vpack.c.b16 %v835, %v834
        %v850 = vpack.c.b16 %v837, %v836
        %v851 = vpack.c.b16 %v839, %v838
        %v852 = vpack.c.b16 %v841, %v840
        %v853 = vpack.c.b16 %v843, %v842
        %v854 = vpack.c.b16 %v845, %v844
        %v855 = vpack.c.b16 %v847, %v846
        %864 = vmatprep.subr.bf16.mxu0 0
        %865 = vmatpush1.bf16.msra.mxu0 %v848
        %866 = vmatprep.subr.bf16.mxu0 0
        %867 = vmatpush1.bf16.msra.mxu0 %v849
        %868 = vmatprep.subr.bf16.mxu0 0
        %869 = vmatpush1.bf16.msra.mxu0 %v850
        %870 = vmatprep.subr.bf16.mxu0 0
        %871 = vmatpush1.bf16.msra.mxu0 %v851
        %872 = vmatprep.subr.bf16.mxu0 0
        %873 = vmatpush1.bf16.msra.mxu0 %v852
        %874 = vmatprep.subr.bf16.mxu0 0
        %875 = vmatpush1.bf16.msra.mxu0 %v853
        %876 = vmatprep.subr.bf16.mxu0 0
        %877 = vmatpush1.bf16.msra.mxu0 %v854
        %878 = vmatprep.subr.bf16.mxu0 0
        %879 = vmatpush1.bf16.msra.mxu0 %v855
        %880 = vmatprep.subr.bf16.mxu0 0
        %881 = vmatpush1.bf16.msra.mxu0 0
        %882 = vmatprep.subr.bf16.mxu0 0
        %883 = vmatpush1.bf16.msra.mxu0 0
        %884 = vmatprep.subr.bf16.mxu0 0
        %885 = vmatpush1.bf16.msra.mxu0 0
        %886 = vmatprep.subr.bf16.mxu0 0
        %887 = vmatpush1.bf16.msra.mxu0 0
        %888 = vmatprep.subr.bf16.mxu0 0
        %889 = vmatpush1.bf16.msra.mxu0 0
        %890 = vmatprep.subr.bf16.mxu0 0
        %891 = vmatpush1.bf16.msra.mxu0 0
        %892 = vmatprep.subr.bf16.mxu0 0
        %893 = vmatpush1.bf16.msra.mxu0 0
        %894 = vmatprep.subr.bf16.mxu0 0
        %895 = vmatpush1.bf16.msra.mxu0 0
        %896 = vmatprep.mubr.bf16.mxu0 0
        %897 = vmatmul.mubr.bf16.gmra.mrb[0].mxu0 %v792
        %v898 = vpop.f32.mrb[0].mxu0
        %v899 = vadd.f32 %v814, %v898
        %v900 = vpop.f32.mrb[0].mxu0
        %v901 = vpop.f32.mrb[0].mxu0
        %v902 = vadd.f32 %v814, %v901
        %v903 = vpop.f32.mrb[0].mxu0
        %904 = vdwg.mxu0
        %v905 = vtanh.pop %v899
        %v906 = vtanh.pop %v902
        %vm907 = vcmask 261120
        %908 = vst.msk [vmem:[%s379] sm:$0xff] %vm907, %v905
        %909 = vst.msk [vmem:[%s379 + $0x8] sm:$0xff] %vm907, %v906
        %s910 = sand.u32 %s229, 1
        %s911 = scalar_lea.sflag [#allocation4], %s910
        %s912 = sand.u32 %s229, 1
        %s913 = smul.addr %s912, 16
        %s914 = scalar_lea.vmem [#allocation8], %s913
        // Predicated region
        $region69: #{tpu_custom_call.1} parent=55 // pred_check
          %p915 = pneg %p239
        $region70: #{tpu_custom_call.1} parent=55 // pred_check_branch
          %917 = sbr.rel (%p915) target = $region72
        $region71: #{tpu_custom_call.1} parent=55 // pred_region
          %s918 = smul.u32 2, %s27
          %s920 = ssub.s32 256, 256
          %921 = vsyncadd %s911, %s920
          %s922 = smul.addr %s918, 128
          %s923 = scalar_lea.hbm %s9, %s922
          %s924 = sshll.u32 %s914, 4
          %s925 = int_to_ptr.vmem [resolvable:$true] %s924
          %930 = dma.vmem_to_hbm [thread:$0]  %s925, 256, %s923, %s911, 128, 128, 8
        $region72: #{tpu_custom_call.1} parent=55 // pred_fallthru
          _
      $region56: #{tpu_custom_call.1} parent=5 // pred_fallthru
        _
      %p931 = scmp.le.s32.totalorder 2, %s22
      // Predicated region
      $region73: #{tpu_custom_call.1} parent=5 // pred_check
        %p932 = pneg %p931
      $region74: #{tpu_custom_call.1} parent=5 // pred_check_branch
        %934 = sbr.rel (%p932) target = $region76
      $region75: #{tpu_custom_call.1} parent=5 // pred_region
        %s935 = ssub.s32 %s22, 2
        // Predicated region
        $region77: #{tpu_custom_call.1} parent=75 // pred_check
          %p936 = pneg %p245
        $region78: #{tpu_custom_call.1} parent=75 // pred_check_branch
          %938 = sbr.rel (%p936) target = $region80
        $region79: #{tpu_custom_call.1} parent=75 // pred_region
          %s939 = sand.u32 %s230, 1
          %s940 = scalar_lea.sflag [#allocation4], %s939
          %s941 = sand.u32 %s230, 1
          %s942 = smul.addr %s941, 16
          %s943 = scalar_lea.vmem [#allocation8], %s942
          %944 = dma.done %s940, 256
        $region80: #{tpu_custom_call.1} parent=75 // pred_fallthru
          _
      $region76: #{tpu_custom_call.1} parent=5 // pred_fallthru
        _
    $region6: #{tpu_custom_call.1} parent=1 // loop_footer
      %s26 = sadd.s32 1, %s22
    $region7: #{tpu_custom_call.1} parent=1 // loop_footer_branch
      %21 = sbr.rel target = $region3
    $region8: #{tpu_custom_call.1} parent=1 // loop_exit
      _
    %945 = vsyncpa [#allocation3], 1
    %s946 = scalar_lea.sflag [#allocation3], 1
    %947 = vsyncpa %s946, 1
    %948 = vsyncpa [#allocation6], 1
    %949 = vsyncpa [#allocation4], 1
    %s950 = scalar_lea.sflag [#allocation4], 1
    %951 = vsyncpa %s950, 1

</llo_original>
